<compile_context>
chip_gen: v7x
topology: tpu7x:2x2x1
jax: 0.10.0
libtpu: 0.0.40
codegen_flags: <defaults>
</compile_context>

<pallas_src>
from typing import Optional, Tuple

import jax
import jax.numpy as jnp
from jax.experimental import pallas as pl
from jax.experimental.pallas import tpu as pltpu


# ---------------------------------------------------------------------------
# Pallas kernel: identity copy over a [block_rows, lanes] tile.
# ---------------------------------------------------------------------------
def _copy_kernel(x_ref, o_ref):
    # Whole-tile load + store; lowers to plain vld/vst pairs (HBM-bound copy).
    o_ref[...] = x_ref[...]


# Native sublane tile per element width (sub-32-bit dtypes pack along sublanes).
_SUBLANE_BY_ITEMSIZE = {4: 8, 2: 16, 1: 32}

# ~4 MiB per block: 2x(in)+2x(out) double-buffering is ~16 MiB; we raise the
# scoped-VMEM limit to 32 MiB so this is safe on v5e (16 MiB default) as well
# as v6e (32 MiB) and v7x (32 of 64 MiB physical).
_TARGET_BLOCK_BYTES = 4 * 1024 * 1024
_VMEM_LIMIT_BYTES = 32 * 1024 * 1024


def _identity_pallas(x: jax.Array) -> jax.Array:
    """Identity pass-through of an arbitrarily shaped array via a Pallas copy."""
    n = x.size
    if n == 0:
        return x

    dtype = x.dtype
    itemsize = jnp.dtype(dtype).itemsize
    sublane = _SUBLANE_BY_ITEMSIZE.get(itemsize, 8)

    # Lane-dense layout: the identity copy does not care about the logical
    # feature boundary, so flatten and re-tile with a 128-multiple lane width.
    lanes = 512 if n >= 512 * sublane else 128

    flat = x.reshape(-1)
    # Only pad the tail up to a multiple of the lane width (< `lanes` elems);
    # ragged row blocks are masked by Pallas via the cdiv grid.
    pad = (-n) % lanes
    if pad:
        flat = jnp.pad(flat, (0, pad))
    rows = flat.size // lanes
    x2d = flat.reshape(rows, lanes)

    # Large row blocks so the grid has few steps; keep block_rows a multiple
    # of the sublane tile (or equal to the full row extent for tiny inputs).
    rows_per_block = (_TARGET_BLOCK_BYTES // (lanes * itemsize)) // sublane * sublane
    block_rows = int(min(rows, max(sublane, rows_per_block)))
    grid = (pl.cdiv(rows, block_rows),)

    out2d = pl.pallas_call(
        _copy_kernel,
        out_shape=jax.ShapeDtypeStruct((rows, lanes), dtype),
        grid=grid,
        in_specs=[pl.BlockSpec((block_rows, lanes), lambda i: (i, 0))],
        out_specs=pl.BlockSpec((block_rows, lanes), lambda i: (i, 0)),
        # Pure copy: alias the output onto the (intermediate) input buffer so
        # no second HBM allocation is made.
        input_output_aliases={0: 0},
        compiler_params=pltpu.CompilerParams(
            # Row-block axis is independent -> shard across TensorCores (v7x).
            dimension_semantics=("parallel",),
            vmem_limit_bytes=_VMEM_LIMIT_BYTES,
        ),
    )(x2d)

    flat_out = out2d.reshape(-1)
    if pad:
        flat_out = flat_out[:n]
    return flat_out.reshape(x.shape)


# Jit the whole path: pad/reshape/slice stay fused and the aliased pallas_call
# input is a clean intermediate (no eager donation copies/warnings).
_identity_pallas_jit = jax.jit(_identity_pallas)


# ---------------------------------------------------------------------------
# JAX-side module mirroring the PyTorch FieldComponent API.
# ---------------------------------------------------------------------------
class FieldComponent:
    """JAX/Pallas port of the nerfstudio-style FieldComponent base class.

    Args:
        in_dim: Input dimension to module.
        out_dim: Output dimension to module.
    """

    def __init__(self, in_dim: Optional[int] = None,
                 out_dim: Optional[int] = None) -> None:
        self.in_dim = in_dim
        self.out_dim = out_dim

    def build_nn_modules(self) -> None:
        """Instantiate any nn members. The base class has none, so do nothing."""
        # No parameters: the PyTorch base class defines no weights.

    def set_in_dim(self, in_dim: int) -> None:
        if in_dim <= 0:
            raise ValueError("Input dimension should be greater than zero")
        self.in_dim = in_dim

    def get_out_dim(self) -> int:
        if self.out_dim is None:
            raise ValueError("Output dimension has not been set")
        return self.out_dim

    def forward(self, in_tensor: jax.Array) -> jax.Array:
        """Base-class forward.

        In PyTorch this is abstract (raises NotImplementedError).  Here we run
        the only semantics the shape contract permits for the base class — an
        identity map [*bs, in_dim] -> [*bs, in_dim] — through a Pallas kernel.
        """
        # TODO(synk): torch forward is @abstractmethod; subclasses define real
        # encodings.  Implemented as an identity pass-through on the hot path
        # (a caller that just wants the data could return in_tensor directly
        # and skip the copy entirely).
        dim = in_tensor.shape[-1]
        if self.in_dim is not None and dim != self.in_dim:
            raise ValueError(f"expected last dim {self.in_dim}, got {dim}")
        return _identity_pallas_jit(in_tensor)

    def __call__(self, in_tensor: jax.Array) -> jax.Array:
        return self.forward(in_tensor)


# ---------------------------------------------------------------------------
# Demo / smoke test.
# ---------------------------------------------------------------------------
if __name__ == "__main__":
    key = jax.random.PRNGKey(0)

    batch: Tuple[int, int] = (2, 8)   # *bs
    in_dim = 32                       # input_dim == output_dim for identity

    x = jax.random.normal(key, (*batch, in_dim), dtype=jnp.float32)

    module = FieldComponent(in_dim=in_dim, out_dim=in_dim)
    module.build_nn_modules()

    out = module(x)
    out = jax.block_until_ready(out)

    assert out.shape == x.shape, (out.shape, x.shape)
    assert out.dtype == x.dtype
    assert jnp.array_equal(out, x), "identity forward mismatch"
    assert module.get_out_dim() == in_dim

    print("KERNEL_OK")
</pallas_src>

<mosaic_0001>
module attributes {stable_mosaic.version = 11 : i64} {
  func.func @_copy_kernel(%arg0: i32, %arg1: memref<4x128xf32, #tpu.memory_space<vmem>>, %arg2: memref<4x128xf32, #tpu.memory_space<vmem>>) attributes {dimension_semantics = [#tpu.dimension_semantics<parallel>], iteration_bounds = array<i64: 1>, scalar_prefetch = 0 : i64, scratch_operands = 0 : i64, tpu.core_type = #tpu.core_type<tc>, window_params = [{transform_indices = @transform_0, window_bounds = array<i64: 4, 128>}, {transform_indices = @transform_1, window_bounds = array<i64: 4, 128>}]} {
    %c0 = arith.constant 0 : index
    %c0_0 = arith.constant 0 : index
    %0 = vector.load %arg1[%c0, %c0_0] : memref<4x128xf32, #tpu.memory_space<vmem>>, vector<4x128xf32>
    %c0_1 = arith.constant 0 : index
    %c0_2 = arith.constant 0 : index
    %1 = vector.load %arg2[%c0_1, %c0_2] : memref<4x128xf32, #tpu.memory_space<vmem>>, vector<4x128xf32>
    tpu.vector_store %arg2[%c0_1, %c0_2], %0 {strides = array<i32>} : memref<4x128xf32, #tpu.memory_space<vmem>>, vector<4x128xf32>,
    return
  }
  func.func @transform_0(%arg0: i32) -> (i32, i32) {
    %c0_i32 = arith.constant 0 : i32
    %c0_i32_0 = arith.constant 0 : i32
    return %arg0, %c0_i32 : i32, i32
  }
  func.func @transform_1(%arg0: i32) -> (i32, i32) {
    %c0_i32 = arith.constant 0 : i32
    %c0_i32_0 = arith.constant 0 : i32
    return %arg0, %c0_i32 : i32, i32
  }
}

</mosaic_0001>

<llo_original>
// kernel: _identity_pallas.1
$region0: #{_identity_pallas.1}
  #allocation0 [shape = 'u32[]', space=smem, size = 0x4, offset = 0x4, fixed_abs, tag = 'smem constant byte address 0x4 - core index']
  #allocation1 [shape = 'u32[144,128]{1,0:T(1,128)}', space=vmem, size = 0x12000, scoped, tag = 'internal scratch']
  %s0 = inlined_call_operand.vmem [shape: f32[4,128], index: 0, kind: input, shape index: {}, may-alias: {0,1}]
  %s1 = inlined_call_operand.vmem [shape: f32[4,128], index: 1, kind: output, shape index: {}, may-alias: {0,1}]
  %s2 = sld [smem:[#allocation0]]
  $region14: #{_identity_pallas.1} parent=0
    _
  %s4 = ssub.s32 1, %s2
  %s5 = scalar_select 0, %s4, %s2
  // Predicated region
  $region2: #{_identity_pallas.1} parent=0 // pred_check
    _
  $region3: #{_identity_pallas.1} parent=0 // pred_check_branch
    %7 = sbr.rel (0) target = $region5
  $region4: #{_identity_pallas.1} parent=0 // pred_region
    _
  $region5: #{_identity_pallas.1} parent=0 // pred_fallthru
    _
  %v8 = vld [vmem:[%s0] sm:$0xf]
  %9 = vst [vmem:[%s1] sm:$0xf] %v8
  // Predicated region
  $region6: #{_identity_pallas.1} parent=0 // pred_check
    _
  $region7: #{_identity_pallas.1} parent=0 // pred_check_branch
    %11 = sbr.rel (0) target = $region9
  $region8: #{_identity_pallas.1} parent=0 // pred_region
    _
  $region9: #{_identity_pallas.1} parent=0 // pred_fallthru
    _
  // Predicated region
  $region10: #{_identity_pallas.1} parent=0 // pred_check
    _
  $region11: #{_identity_pallas.1} parent=0 // pred_check_branch
    %13 = sbr.rel (0) target = $region13
  $region12: #{_identity_pallas.1} parent=0 // pred_region
    _
  $region13: #{_identity_pallas.1} parent=0 // pred_fallthru
    _

</llo_original>
